<compile_context>
chip_gen: v7x
topology: tpu7x:2x2x1
jax: 0.10.0
libtpu: 0.0.40
codegen_flags: <defaults>
</compile_context>

<pallas_src>
import functools

import jax
import jax.numpy as jnp
from jax.experimental import pallas as pl
from jax.experimental.pallas import tpu as pltpu


def _gelu_erf(x):
    """GELU with erf via A&S 7.1.26 (|erf err| ~1.5e-7); divide on EUP via approx recip."""
    inv_sqrt2 = 0.7071067811865476
    z = x * inv_sqrt2
    a1, a2, a3, a4, a5 = 0.254829592, -0.284496736, 1.421413741, -1.453152027, 1.061405429
    p = 0.3275911
    sgn = jnp.where(z >= 0.0, 1.0, -1.0)
    za = jnp.abs(z)
    t = pl.reciprocal(1.0 + p * za, approx=True)          # EUP vrcp (frees VALU slot)
    poly = ((((a5 * t + a4) * t + a3) * t + a2) * t + a1) * t
    erf = sgn * (1.0 - poly * jnp.exp(-za * za))           # exp on EUP
    return 0.5 * x * (1.0 + erf)


def _dsc_gelu_kernel(w_ref, p_ref, o_ref):
    """One depthwise-separable conv stage + GELU on a lane-dense tile of M pixels.

    w_ref: (C, KK*C)     folded depthwise+pointwise weight (constant block across grid)
    p_ref: (KK*C, TM)    im2col patches, pixels on the lane axis
    o_ref: (C, TM)       gelu(pointwise(depthwise(x)))
    """
    z = jnp.dot(w_ref[...], p_ref[...], preferred_element_type=jnp.float32)
    o_ref[...] = _gelu_erf(z).astype(o_ref.dtype)


def _extract_patches_cf(x_cnhw, k, s):
    """im2col for stride == kernel_size, padding == 0, channels-first input (C, N, H, W).

    Returns patches of shape (k*k*C, M) with M = N*Ho*Wo on the last (lane) axis and the
    contraction axis ordered (i, j, c) with c fastest (matches the folded weight layout).
    """
    assert s == k, "GlobalContextExtractor config uses stride == kernel_size"
    # TODO(synk): general stride != kernel_size would need a gather-based im2col.
    C, N, H, W = x_cnhw.shape
    Ho = (H - k) // s + 1
    Wo = (W - k) // s + 1
    x = x_cnhw[:, :, : Ho * k, : Wo * k]
    x = x.reshape(C, N, Ho, k, Wo, k)
    x = x.transpose(3, 5, 0, 1, 2, 4)              # (k, k, C, N, Ho, Wo)
    patches = x.reshape(k * k * C, N * Ho * Wo)    # (KK*C, M)
    return patches, (N, Ho, Wo, C)


def _dsc_stage(x_cnhw, w_comb, k, s, *, tile_m_max=2048):
    """depthwise_separable_conv + gelu for one stage.

    x_cnhw: (C, N, H, W);  w_comb: (C_out, k*k*C_in).  Returns (C, N, Ho, Wo).
    """
    patches, (N, Ho, Wo, C) = _extract_patches_cf(x_cnhw, k, s)
    KKC, M = patches.shape

    # Lane axis padded to a multiple of 128 -> unmasked stores; one grid step per tile_m.
    m_pad = pl.cdiv(M, 128) * 128
    tile_m = min(tile_m_max, m_pad)
    m_pad = pl.cdiv(m_pad, tile_m) * tile_m
    patches = jnp.pad(patches, ((0, 0), (0, m_pad - M)))

    out = pl.pallas_call(
        _dsc_gelu_kernel,
        out_shape=jax.ShapeDtypeStruct((C, m_pad), x_cnhw.dtype),
        grid=(m_pad // tile_m,),
        in_specs=[
            pl.BlockSpec((C, KKC), lambda i: (0, 0)),       # weight, constant block
            pl.BlockSpec((KKC, tile_m), lambda i: (0, i)),  # patches tile (lane-dense)
        ],
        out_specs=pl.BlockSpec((C, tile_m), lambda i: (0, i)),
        compiler_params=pltpu.CompilerParams(dimension_semantics=("parallel",)),
    )(w_comb, patches)

    return out[:, :M].reshape(C, N, Ho, Wo)


def init_params(key, c, kernel_sizes=(3, 3, 5)):
    """Deterministic synthetic weights.

    Per stage:
      depthwise weight dw: (k, k, C)   (== torch (C,1,k,k) with dw[i,j,c] = W[c,0,i,j])
      pointwise weight pw: (C, C)      (== torch (C_out, C_in, 1, 1) squeezed)
    """
    params = []
    for k in kernel_sizes:
        key, k1, k2 = jax.random.split(key, 3)
        dw = jax.random.normal(k1, (k, k, c), jnp.float32) * (1.0 / (k * k))
        pw = jax.random.normal(k2, (c, c), jnp.float32) * (1.0 / jnp.sqrt(c))
        params.append((dw, pw))
    return params


@functools.partial(jax.jit, static_argnames=("kernel_sizes", "strides"))
def global_context_extractor(x_nchw, params, kernel_sizes=(3, 3, 5), strides=(3, 3, 5)):
    """Forward pass. x_nchw: (N, C, H, W) like the PyTorch module. Returns list of NCHW arrays."""
    x = jnp.transpose(x_nchw, (1, 0, 2, 3))  # NCHW -> CNHW, channels-first throughout
    outputs = []
    for (dw, pw), k, s in zip(params, kernel_sizes, strides):
        C = x.shape[0]
        # Fold depthwise into pointwise: W_comb[o, (i,j,c)] = pw[o, c] * dw[i, j, c].
        w_comb = (pw[:, None, None, :] * dw[None, :, :, :]).reshape(C, k * k * C)
        x = _dsc_stage(x, w_comb, k, s)                 # (C, N, Ho, Wo), feeds next stage
        outputs.append(jnp.transpose(x, (1, 0, 2, 3)))  # NCHW, like the torch module
    return outputs


def _reference(x_nchw, params, kernel_sizes, strides):
    """Pure-JAX reference matching the PyTorch module (exact-erf GELU)."""
    x = x_nchw
    outs = []
    for (dw, pw), k, s in zip(params, kernel_sizes, strides):
        C = x.shape[1]
        w_dw = jnp.transpose(dw, (2, 0, 1))[:, None, :, :]   # (C, 1, k, k), groups=C
        y = jax.lax.conv_general_dilated(
            x, w_dw, window_strides=(s, s), padding="VALID",
            dimension_numbers=("NCHW", "OIHW", "NCHW"), feature_group_count=C)
        w_pw = pw[:, :, None, None]                           # (C_out, C_in, 1, 1)
        z = jax.lax.conv_general_dilated(
            y, w_pw, window_strides=(1, 1), padding="VALID",
            dimension_numbers=("NCHW", "OIHW", "NCHW"))
        x = jax.nn.gelu(z, approximate=False)
        outs.append(x)
    return outs


if __name__ == "__main__":
    key = jax.random.PRNGKey(0)
    kx, kp = jax.random.split(key)

    N, C, H, W = 2, 8, 45, 45  # 45 -> 15 -> 5 -> 1 through the three stages
    x = jax.random.normal(kx, (N, C, H, W), jnp.float32)
    params = init_params(kp, C)

    outs = global_context_extractor(x, params)
    outs = [jax.block_until_ready(o) for o in outs]

    expected = [(N, C, 15, 15), (N, C, 5, 5), (N, C, 1, 1)]
    assert [tuple(o.shape) for o in outs] == expected, [o.shape for o in outs]
    assert all(bool(jnp.all(jnp.isfinite(o))) for o in outs)

    refs = _reference(x, params, (3, 3, 5), (3, 3, 5))
    for o, r in zip(outs, refs):
        err = float(jnp.max(jnp.abs(o - r)))
        assert bool(jnp.allclose(o, r, atol=5e-3, rtol=5e-3)), err

    print("KERNEL_OK")
</pallas_src>

<mosaic_0001>
module attributes {stable_mosaic.version = 11 : i64} {
  func.func @_dsc_gelu_kernel(%arg0: i32, %arg1: memref<8x72xf32, #tpu.memory_space<vmem>>, %arg2: memref<72x512xf32, #tpu.memory_space<vmem>>, %arg3: memref<8x512xf32, #tpu.memory_space<vmem>>) attributes {dimension_semantics = [#tpu.dimension_semantics<parallel>], iteration_bounds = array<i64: 1>, scalar_prefetch = 0 : i64, scratch_operands = 0 : i64, tpu.core_type = #tpu.core_type<tc>, window_params = [{pipeline_mode = #tpu.pipeline_mode<synchronous>, transform_indices = @transform_0, window_bounds = array<i64: 8, 72>}, {transform_indices = @transform_1, window_bounds = array<i64: 72, 512>}, {transform_indices = @transform_2, window_bounds = array<i64: 8, 512>}]} {
    %c0 = arith.constant 0 : index
    %c0_0 = arith.constant 0 : index
    %0 = vector.load %arg1[%c0, %c0_0] : memref<8x72xf32, #tpu.memory_space<vmem>>, vector<8x72xf32>
    %c0_1 = arith.constant 0 : index
    %c0_2 = arith.constant 0 : index
    %1 = vector.load %arg2[%c0_1, %c0_2] : memref<72x512xf32, #tpu.memory_space<vmem>>, vector<72x512xf32>
    %cst = arith.constant dense<0.000000e+00> : vector<8x512xf32>
    %2 = tpu.matmul %0, %1, %cst {dimension_numbers = #tpu.dot_dimension_numbers<[1], [0], [0], [1], [0, 0, 1, 1], [], []>} : vector<8x72xf32>, vector<72x512xf32>, vector<8x512xf32> -> vector<8x512xf32>
    %cst_3 = arith.constant 0.707106769 : f32
    %3 = vector.broadcast %cst_3 : f32 to vector<8x512xf32>
    %4 = arith.mulf %2, %3 : vector<8x512xf32>
    %cst_4 = arith.constant 0.000000e+00 : f32
    %5 = vector.broadcast %cst_4 : f32 to vector<8x512xf32>
    %6 = arith.cmpf oge, %4, %5 : vector<8x512xf32>
    %cst_5 = arith.constant 1.000000e+00 : f32
    %cst_6 = arith.constant -1.000000e+00 : f32
    %7 = vector.broadcast %cst_5 : f32 to vector<8x512xf32>
    %8 = vector.broadcast %cst_6 : f32 to vector<8x512xf32>
    %9 = arith.select %6, %7, %8 : vector<8x512xi1>, vector<8x512xf32>
    %10 = math.absf %4 : vector<8x512xf32>
    %cst_7 = arith.constant 0.327591091 : f32
    %11 = vector.broadcast %cst_7 : f32 to vector<8x512xf32>
    %12 = arith.mulf %11, %10 : vector<8x512xf32>
    %cst_8 = arith.constant 1.000000e+00 : f32
    %13 = vector.broadcast %cst_8 : f32 to vector<8x512xf32>
    %14 = arith.addf %13, %12 : vector<8x512xf32>
    %15 = tpu.reciprocal %14 {approx = true} : vector<8x512xf32> -> vector<8x512xf32>
    %cst_9 = arith.constant 1.06140542 : f32
    %16 = vector.broadcast %cst_9 : f32 to vector<8x512xf32>
    %17 = arith.mulf %16, %15 : vector<8x512xf32>
    %cst_10 = arith.constant -1.45315206 : f32
    %18 = vector.broadcast %cst_10 : f32 to vector<8x512xf32>
    %19 = arith.addf %17, %18 : vector<8x512xf32>
    %20 = arith.mulf %19, %15 : vector<8x512xf32>
    %cst_11 = arith.constant 1.42141378 : f32
    %21 = vector.broadcast %cst_11 : f32 to vector<8x512xf32>
    %22 = arith.addf %20, %21 : vector<8x512xf32>
    %23 = arith.mulf %22, %15 : vector<8x512xf32>
    %cst_12 = arith.constant -0.284496725 : f32
    %24 = vector.broadcast %cst_12 : f32 to vector<8x512xf32>
    %25 = arith.addf %23, %24 : vector<8x512xf32>
    %26 = arith.mulf %25, %15 : vector<8x512xf32>
    %cst_13 = arith.constant 0.254829586 : f32
    %27 = vector.broadcast %cst_13 : f32 to vector<8x512xf32>
    %28 = arith.addf %26, %27 : vector<8x512xf32>
    %29 = arith.mulf %28, %15 : vector<8x512xf32>
    %cst_14 = arith.constant 0.000000e+00 : f32
    %30 = vector.broadcast %cst_14 : f32 to vector<8x512xf32>
    %31 = arith.subf %30, %10 : vector<8x512xf32>
    %32 = arith.mulf %31, %10 : vector<8x512xf32>
    %33 = math.exp %32 : vector<8x512xf32>
    %34 = arith.mulf %29, %33 : vector<8x512xf32>
    %cst_15 = arith.constant 1.000000e+00 : f32
    %35 = vector.broadcast %cst_15 : f32 to vector<8x512xf32>
    %36 = arith.subf %35, %34 : vector<8x512xf32>
    %37 = arith.mulf %9, %36 : vector<8x512xf32>
    %cst_16 = arith.constant 5.000000e-01 : f32
    %38 = vector.broadcast %cst_16 : f32 to vector<8x512xf32>
    %39 = arith.mulf %38, %2 : vector<8x512xf32>
    %cst_17 = arith.constant 1.000000e+00 : f32
    %40 = vector.broadcast %cst_17 : f32 to vector<8x512xf32>
    %41 = arith.addf %40, %37 : vector<8x512xf32>
    %42 = arith.mulf %39, %41 : vector<8x512xf32>
    %c0_18 = arith.constant 0 : index
    %c0_19 = arith.constant 0 : index
    %43 = vector.load %arg3[%c0_18, %c0_19] : memref<8x512xf32, #tpu.memory_space<vmem>>, vector<8x512xf32>
    tpu.vector_store %arg3[%c0_18, %c0_19], %42 {strides = array<i32>} : memref<8x512xf32, #tpu.memory_space<vmem>>, vector<8x512xf32>,
    return
  }
  func.func @transform_0(%arg0: i32) -> (i32, i32) {
    %c0_i32 = arith.constant 0 : i32
    %c0_i32_0 = arith.constant 0 : i32
    %c0_i32_1 = arith.constant 0 : i32
    return %c0_i32, %c0_i32_0 : i32, i32
  }
  func.func @transform_1(%arg0: i32) -> (i32, i32) {
    %c0_i32 = arith.constant 0 : i32
    %c0_i32_0 = arith.constant 0 : i32
    return %c0_i32, %arg0 : i32, i32
  }
  func.func @transform_2(%arg0: i32) -> (i32, i32) {
    %c0_i32 = arith.constant 0 : i32
    %c0_i32_0 = arith.constant 0 : i32
    return %c0_i32, %arg0 : i32, i32
  }
}

module attributes {stable_mosaic.version = 11 : i64} {
  func.func @_dsc_gelu_kernel(%arg0: i32, %arg1: memref<8x72xf32, #tpu.memory_space<vmem>>, %arg2: memref<72x128xf32, #tpu.memory_space<vmem>>, %arg3: memref<8x128xf32, #tpu.memory_space<vmem>>) attributes {dimension_semantics = [#tpu.dimension_semantics<parallel>], iteration_bounds = array<i64: 1>, scalar_prefetch = 0 : i64, scratch_operands = 0 : i64, tpu.core_type = #tpu.core_type<tc>, window_params = [{pipeline_mode = #tpu.pipeline_mode<synchronous>, transform_indices = @transform_0, window_bounds = array<i64: 8, 72>}, {transform_indices = @transform_1, window_bounds = array<i64: 72, 128>}, {transform_indices = @transform_2, window_bounds = array<i64: 8, 128>}]} {
    %c0 = arith.constant 0 : index
    %c0_0 = arith.constant 0 : index
    %0 = vector.load %arg1[%c0, %c0_0] : memref<8x72xf32, #tpu.memory_space<vmem>>, vector<8x72xf32>
    %c0_1 = arith.constant 0 : index
    %c0_2 = arith.constant 0 : index
    %1 = vector.load %arg2[%c0_1, %c0_2] : memref<72x128xf32, #tpu.memory_space<vmem>>, vector<72x128xf32>
    %cst = arith.constant dense<0.000000e+00> : vector<8x128xf32>
    %2 = tpu.matmul %0, %1, %cst {dimension_numbers = #tpu.dot_dimension_numbers<[1], [0], [0], [1], [0, 0, 1, 1], [], []>} : vector<8x72xf32>, vector<72x128xf32>, vector<8x128xf32> -> vector<8x128xf32>
    %cst_3 = arith.constant 0.707106769 : f32
    %3 = vector.broadcast %cst_3 : f32 to vector<8x128xf32>
    %4 = arith.mulf %2, %3 : vector<8x128xf32>
    %cst_4 = arith.constant 0.000000e+00 : f32
    %5 = vector.broadcast %cst_4 : f32 to vector<8x128xf32>
    %6 = arith.cmpf oge, %4, %5 : vector<8x128xf32>
    %cst_5 = arith.constant 1.000000e+00 : f32
    %cst_6 = arith.constant -1.000000e+00 : f32
    %7 = vector.broadcast %cst_5 : f32 to vector<8x128xf32>
    %8 = vector.broadcast %cst_6 : f32 to vector<8x128xf32>
    %9 = arith.select %6, %7, %8 : vector<8x128xi1>, vector<8x128xf32>
    %10 = math.absf %4 : vector<8x128xf32>
    %cst_7 = arith.constant 0.327591091 : f32
    %11 = vector.broadcast %cst_7 : f32 to vector<8x128xf32>
    %12 = arith.mulf %11, %10 : vector<8x128xf32>
    %cst_8 = arith.constant 1.000000e+00 : f32
    %13 = vector.broadcast %cst_8 : f32 to vector<8x128xf32>
    %14 = arith.addf %13, %12 : vector<8x128xf32>
    %15 = tpu.reciprocal %14 {approx = true} : vector<8x128xf32> -> vector<8x128xf32>
    %cst_9 = arith.constant 1.06140542 : f32
    %16 = vector.broadcast %cst_9 : f32 to vector<8x128xf32>
    %17 = arith.mulf %16, %15 : vector<8x128xf32>
    %cst_10 = arith.constant -1.45315206 : f32
    %18 = vector.broadcast %cst_10 : f32 to vector<8x128xf32>
    %19 = arith.addf %17, %18 : vector<8x128xf32>
    %20 = arith.mulf %19, %15 : vector<8x128xf32>
    %cst_11 = arith.constant 1.42141378 : f32
    %21 = vector.broadcast %cst_11 : f32 to vector<8x128xf32>
    %22 = arith.addf %20, %21 : vector<8x128xf32>
    %23 = arith.mulf %22, %15 : vector<8x128xf32>
    %cst_12 = arith.constant -0.284496725 : f32
    %24 = vector.broadcast %cst_12 : f32 to vector<8x128xf32>
    %25 = arith.addf %23, %24 : vector<8x128xf32>
    %26 = arith.mulf %25, %15 : vector<8x128xf32>
    %cst_13 = arith.constant 0.254829586 : f32
    %27 = vector.broadcast %cst_13 : f32 to vector<8x128xf32>
    %28 = arith.addf %26, %27 : vector<8x128xf32>
    %29 = arith.mulf %28, %15 : vector<8x128xf32>
    %cst_14 = arith.constant 0.000000e+00 : f32
    %30 = vector.broadcast %cst_14 : f32 to vector<8x128xf32>
    %31 = arith.subf %30, %10 : vector<8x128xf32>
    %32 = arith.mulf %31, %10 : vector<8x128xf32>
    %33 = math.exp %32 : vector<8x128xf32>
    %34 = arith.mulf %29, %33 : vector<8x128xf32>
    %cst_15 = arith.constant 1.000000e+00 : f32
    %35 = vector.broadcast %cst_15 : f32 to vector<8x128xf32>
    %36 = arith.subf %35, %34 : vector<8x128xf32>
    %37 = arith.mulf %9, %36 : vector<8x128xf32>
    %cst_16 = arith.constant 5.000000e-01 : f32
    %38 = vector.broadcast %cst_16 : f32 to vector<8x128xf32>
    %39 = arith.mulf %38, %2 : vector<8x128xf32>
    %cst_17 = arith.constant 1.000000e+00 : f32
    %40 = vector.broadcast %cst_17 : f32 to vector<8x128xf32>
    %41 = arith.addf %40, %37 : vector<8x128xf32>
    %42 = arith.mulf %39, %41 : vector<8x128xf32>
    %c0_18 = arith.constant 0 : index
    %c0_19 = arith.constant 0 : index
    %43 = vector.load %arg3[%c0_18, %c0_19] : memref<8x128xf32, #tpu.memory_space<vmem>>, vector<8x128xf32>
    tpu.vector_store %arg3[%c0_18, %c0_19], %42 {strides = array<i32>} : memref<8x128xf32, #tpu.memory_space<vmem>>, vector<8x128xf32>,
    return
  }
  func.func @transform_0(%arg0: i32) -> (i32, i32) {
    %c0_i32 = arith.constant 0 : i32
    %c0_i32_0 = arith.constant 0 : i32
    %c0_i32_1 = arith.constant 0 : i32
    return %c0_i32, %c0_i32_0 : i32, i32
  }
  func.func @transform_1(%arg0: i32) -> (i32, i32) {
    %c0_i32 = arith.constant 0 : i32
    %c0_i32_0 = arith.constant 0 : i32
    return %c0_i32, %arg0 : i32, i32
  }
  func.func @transform_2(%arg0: i32) -> (i32, i32) {
    %c0_i32 = arith.constant 0 : i32
    %c0_i32_0 = arith.constant 0 : i32
    return %c0_i32, %arg0 : i32, i32
  }
}

module attributes {stable_mosaic.version = 11 : i64} {
  func.func @_dsc_gelu_kernel(%arg0: i32, %arg1: memref<8x200xf32, #tpu.memory_space<vmem>>, %arg2: memref<200x128xf32, #tpu.memory_space<vmem>>, %arg3: memref<8x128xf32, #tpu.memory_space<vmem>>) attributes {dimension_semantics = [#tpu.dimension_semantics<parallel>], iteration_bounds = array<i64: 1>, scalar_prefetch = 0 : i64, scratch_operands = 0 : i64, tpu.core_type = #tpu.core_type<tc>, window_params = [{pipeline_mode = #tpu.pipeline_mode<synchronous>, transform_indices = @transform_0, window_bounds = array<i64: 8, 200>}, {transform_indices = @transform_1, window_bounds = array<i64: 200, 128>}, {transform_indices = @transform_2, window_bounds = array<i64: 8, 128>}]} {
    %c0 = arith.constant 0 : index
    %c0_0 = arith.constant 0 : index
    %0 = vector.load %arg1[%c0, %c0_0] : memref<8x200xf32, #tpu.memory_space<vmem>>, vector<8x200xf32>
    %c0_1 = arith.constant 0 : index
    %c0_2 = arith.constant 0 : index
    %1 = vector.load %arg2[%c0_1, %c0_2] : memref<200x128xf32, #tpu.memory_space<vmem>>, vector<200x128xf32>
    %cst = arith.constant dense<0.000000e+00> : vector<8x128xf32>
    %2 = tpu.matmul %0, %1, %cst {dimension_numbers = #tpu.dot_dimension_numbers<[1], [0], [0], [1], [0, 0, 1, 1], [], []>} : vector<8x200xf32>, vector<200x128xf32>, vector<8x128xf32> -> vector<8x128xf32>
    %cst_3 = arith.constant 0.707106769 : f32
    %3 = vector.broadcast %cst_3 : f32 to vector<8x128xf32>
    %4 = arith.mulf %2, %3 : vector<8x128xf32>
    %cst_4 = arith.constant 0.000000e+00 : f32
    %5 = vector.broadcast %cst_4 : f32 to vector<8x128xf32>
    %6 = arith.cmpf oge, %4, %5 : vector<8x128xf32>
    %cst_5 = arith.constant 1.000000e+00 : f32
    %cst_6 = arith.constant -1.000000e+00 : f32
    %7 = vector.broadcast %cst_5 : f32 to vector<8x128xf32>
    %8 = vector.broadcast %cst_6 : f32 to vector<8x128xf32>
    %9 = arith.select %6, %7, %8 : vector<8x128xi1>, vector<8x128xf32>
    %10 = math.absf %4 : vector<8x128xf32>
    %cst_7 = arith.constant 0.327591091 : f32
    %11 = vector.broadcast %cst_7 : f32 to vector<8x128xf32>
    %12 = arith.mulf %11, %10 : vector<8x128xf32>
    %cst_8 = arith.constant 1.000000e+00 : f32
    %13 = vector.broadcast %cst_8 : f32 to vector<8x128xf32>
    %14 = arith.addf %13, %12 : vector<8x128xf32>
    %15 = tpu.reciprocal %14 {approx = true} : vector<8x128xf32> -> vector<8x128xf32>
    %cst_9 = arith.constant 1.06140542 : f32
    %16 = vector.broadcast %cst_9 : f32 to vector<8x128xf32>
    %17 = arith.mulf %16, %15 : vector<8x128xf32>
    %cst_10 = arith.constant -1.45315206 : f32
    %18 = vector.broadcast %cst_10 : f32 to vector<8x128xf32>
    %19 = arith.addf %17, %18 : vector<8x128xf32>
    %20 = arith.mulf %19, %15 : vector<8x128xf32>
    %cst_11 = arith.constant 1.42141378 : f32
    %21 = vector.broadcast %cst_11 : f32 to vector<8x128xf32>
    %22 = arith.addf %20, %21 : vector<8x128xf32>
    %23 = arith.mulf %22, %15 : vector<8x128xf32>
    %cst_12 = arith.constant -0.284496725 : f32
    %24 = vector.broadcast %cst_12 : f32 to vector<8x128xf32>
    %25 = arith.addf %23, %24 : vector<8x128xf32>
    %26 = arith.mulf %25, %15 : vector<8x128xf32>
    %cst_13 = arith.constant 0.254829586 : f32
    %27 = vector.broadcast %cst_13 : f32 to vector<8x128xf32>
    %28 = arith.addf %26, %27 : vector<8x128xf32>
    %29 = arith.mulf %28, %15 : vector<8x128xf32>
    %cst_14 = arith.constant 0.000000e+00 : f32
    %30 = vector.broadcast %cst_14 : f32 to vector<8x128xf32>
    %31 = arith.subf %30, %10 : vector<8x128xf32>
    %32 = arith.mulf %31, %10 : vector<8x128xf32>
    %33 = math.exp %32 : vector<8x128xf32>
    %34 = arith.mulf %29, %33 : vector<8x128xf32>
    %cst_15 = arith.constant 1.000000e+00 : f32
    %35 = vector.broadcast %cst_15 : f32 to vector<8x128xf32>
    %36 = arith.subf %35, %34 : vector<8x128xf32>
    %37 = arith.mulf %9, %36 : vector<8x128xf32>
    %cst_16 = arith.constant 5.000000e-01 : f32
    %38 = vector.broadcast %cst_16 : f32 to vector<8x128xf32>
    %39 = arith.mulf %38, %2 : vector<8x128xf32>
    %cst_17 = arith.constant 1.000000e+00 : f32
    %40 = vector.broadcast %cst_17 : f32 to vector<8x128xf32>
    %41 = arith.addf %40, %37 : vector<8x128xf32>
    %42 = arith.mulf %39, %41 : vector<8x128xf32>
    %c0_18 = arith.constant 0 : index
    %c0_19 = arith.constant 0 : index
    %43 = vector.load %arg3[%c0_18, %c0_19] : memref<8x128xf32, #tpu.memory_space<vmem>>, vector<8x128xf32>
    tpu.vector_store %arg3[%c0_18, %c0_19], %42 {strides = array<i32>} : memref<8x128xf32, #tpu.memory_space<vmem>>, vector<8x128xf32>,
    return
  }
  func.func @transform_0(%arg0: i32) -> (i32, i32) {
    %c0_i32 = arith.constant 0 : i32
    %c0_i32_0 = arith.constant 0 : i32
    %c0_i32_1 = arith.constant 0 : i32
    return %c0_i32, %c0_i32_0 : i32, i32
  }
  func.func @transform_1(%arg0: i32) -> (i32, i32) {
    %c0_i32 = arith.constant 0 : i32
    %c0_i32_0 = arith.constant 0 : i32
    return %c0_i32, %arg0 : i32, i32
  }
  func.func @transform_2(%arg0: i32) -> (i32, i32) {
    %c0_i32 = arith.constant 0 : i32
    %c0_i32_0 = arith.constant 0 : i32
    return %c0_i32, %arg0 : i32, i32
  }
}

</mosaic_0001>

<llo_original>
// kernel: global_context_extractor.3
$region0: #{global_context_extractor.3}
  #allocation0 [shape = 'u32[]', space=smem, size = 0x4, offset = 0x4, fixed_abs, tag = 'smem constant byte address 0x4 - core index']
  #allocation1 [shape = 'u32[144,128]{1,0:T(1,128)}', space=vmem, size = 0x12000, scoped, tag = 'internal scratch']
  %s0 = inlined_call_operand.vmem [shape: f32[8,72], index: 0, kind: input, shape index: {}]
  %s1 = inlined_call_operand.vmem [shape: f32[72,512], index: 1, kind: input, shape index: {}]
  %s2 = inlined_call_operand.vmem [shape: f32[8,512], index: 2, kind: output, shape index: {}]
  %s3 = sld [smem:[#allocation0]]
  $region18: #{global_context_extractor.3} parent=0
    _
  %s5 = ssub.s32 1, %s3
  %s6 = scalar_select 0, %s5, %s3
  // Predicated region
  $region2: #{global_context_extractor.3} parent=0 // pred_check
    _
  $region3: #{global_context_extractor.3} parent=0 // pred_check_branch
    %8 = sbr.rel (0) target = $region5
  $region4: #{global_context_extractor.3} parent=0 // pred_region
    _
  $region5: #{global_context_extractor.3} parent=0 // pred_fallthru
    _
  // Predicated region
  $region6: #{global_context_extractor.3} parent=0 // pred_check
    _
  $region7: #{global_context_extractor.3} parent=0 // pred_check_branch
    %10 = sbr.rel (0) target = $region9
  $region8: #{global_context_extractor.3} parent=0 // pred_region
    _
  $region9: #{global_context_extractor.3} parent=0 // pred_fallthru
    _
  %v11 = vld [vmem:[%s0] sm:$0xff]
  %v12 = vld [vmem:[%s1] sm:$0xff]
  %v13 = vld [vmem:[%s1 + $0x8] sm:$0xff]
  %v14 = vld [vmem:[%s1 + $0x10] sm:$0xff]
  %v15 = vld [vmem:[%s1 + $0x18] sm:$0xff]
  %v16 = vld [vmem:[%s1 + $0x20] sm:$0xff]
  %v17 = vld [vmem:[%s1 + $0x28] sm:$0xff]
  %v18 = vld [vmem:[%s1 + $0x30] sm:$0xff]
  %v19 = vld [vmem:[%s1 + $0x38] sm:$0xff]
  %v20 = vld [vmem:[%s1 + $0x40] sm:$0xff]
  %v21 = vld [vmem:[%s1 + $0x48] sm:$0xff]
  %v22 = vld [vmem:[%s1 + $0x50] sm:$0xff]
  %v23 = vld [vmem:[%s1 + $0x58] sm:$0xff]
  %v24 = vld [vmem:[%s1 + $0x60] sm:$0xff]
  %v25 = vld [vmem:[%s1 + $0x68] sm:$0xff]
  %v26 = vld [vmem:[%s1 + $0x70] sm:$0xff]
  %v27 = vld [vmem:[%s1 + $0x78] sm:$0xff]
  %v28 = vld [vmem:[%s1 + $0x80] sm:$0xff]
  %v29 = vld [vmem:[%s1 + $0x88] sm:$0xff]
  %v30 = vld [vmem:[%s1 + $0x90] sm:$0xff]
  %v31 = vld [vmem:[%s1 + $0x98] sm:$0xff]
  %v32 = vld [vmem:[%s1 + $0xa0] sm:$0xff]
  %v33 = vld [vmem:[%s1 + $0xa8] sm:$0xff]
  %v34 = vld [vmem:[%s1 + $0xb0] sm:$0xff]
  %v35 = vld [vmem:[%s1 + $0xb8] sm:$0xff]
  %v36 = vld [vmem:[%s1 + $0xc0] sm:$0xff]
  %v37 = vld [vmem:[%s1 + $0xc8] sm:$0xff]
  %v38 = vld [vmem:[%s1 + $0xd0] sm:$0xff]
  %v39 = vld [vmem:[%s1 + $0xd8] sm:$0xff]
  %v40 = vld [vmem:[%s1 + $0xe0] sm:$0xff]
  %v41 = vld [vmem:[%s1 + $0xe8] sm:$0xff]
  %v42 = vld [vmem:[%s1 + $0xf0] sm:$0xff]
  %v43 = vld [vmem:[%s1 + $0xf8] sm:$0xff]
  %v44 = vld [vmem:[%s1 + $0x100] sm:$0xff]
  %v45 = vld [vmem:[%s1 + $0x108] sm:$0xff]
  %v46 = vld [vmem:[%s1 + $0x110] sm:$0xff]
  %v47 = vld [vmem:[%s1 + $0x118] sm:$0xff]
  %vm48 = vcmask 588800
  %v50 = vsel %vm48, %v11, 0
  %52 = vmatprep.subr.mxu0 %v13
  %53 = vmatpush1.msra.mxu0 %v12
  %54 = vmatprep.subr.mxu0 %v17
  %55 = vmatpush1.msra.mxu0 %v16
  %56 = vmatprep.subr.mxu0 %v21
  %57 = vmatpush1.msra.mxu0 %v20
  %58 = vmatprep.subr.mxu0 %v25
  %59 = vmatpush1.msra.mxu0 %v24
  %60 = vmatprep.subr.mxu0 %v29
  %61 = vmatpush1.msra.mxu0 %v28
  %62 = vmatprep.subr.mxu0 %v33
  %63 = vmatpush1.msra.mxu0 %v32
  %64 = vmatprep.subr.mxu0 %v37
  %65 = vmatpush1.msra.mxu0 %v36
  %66 = vmatprep.subr.mxu0 %v41
  %67 = vmatpush1.msra.mxu0 %v40
  %68 = vmatprep.subr.mxu0 %v45
  %69 = vmatpush1.msra.mxu0 %v44
  %70 = vmatprep.subr.mxu0 0.0
  %71 = vmatpush1.msra.mxu0 0.0
  %72 = vmatprep.subr.mxu0 0.0
  %73 = vmatpush1.msra.mxu0 0.0
  %74 = vmatprep.subr.mxu0 0.0
  %75 = vmatpush1.msra.mxu0 0.0
  %76 = vmatprep.subr.mxu0 0.0
  %77 = vmatpush1.msra.mxu0 0.0
  %78 = vmatprep.subr.mxu0 0.0
  %79 = vmatpush1.msra.mxu0 0.0
  %80 = vmatprep.subr.mxu0 0.0
  %81 = vmatpush1.msra.mxu0 0.0
  %82 = vmatprep.subr.mxu0 0.0
  %83 = vmatpush1.msra.mxu0 0.0
  %84 = vmatprep.subr.mxu0 0.0
  %85 = vmatpush1.msra.mxu0 0.0
  %86 = vmatprep.subr.mxu0 0.0
  %87 = vmatpush1.msra.mxu0 0.0
  %88 = vmatprep.subr.mxu0 0.0
  %89 = vmatpush1.msra.mxu0 0.0
  %90 = vmatprep.subr.mxu0 0.0
  %91 = vmatpush1.msra.mxu0 0.0
  %92 = vmatprep.subr.mxu0 0.0
  %93 = vmatpush1.msra.mxu0 0.0
  %94 = vmatprep.subr.mxu0 0.0
  %95 = vmatpush1.msra.mxu0 0.0
  %96 = vmatprep.subr.mxu0 0.0
  %97 = vmatpush1.msra.mxu0 0.0
  %98 = vmatprep.subr.mxu0 0.0
  %99 = vmatpush1.msra.mxu0 0.0
  %100 = vmatprep.subr.mxu0 0.0
  %101 = vmatpush1.msra.mxu0 0.0
  %102 = vmatprep.subr.mxu0 0.0
  %103 = vmatpush1.msra.mxu0 0.0
  %104 = vmatprep.subr.mxu0 0.0
  %105 = vmatpush1.msra.mxu0 0.0
  %106 = vmatprep.subr.mxu0 0.0
  %107 = vmatpush1.msra.mxu0 0.0
  %108 = vmatprep.subr.mxu0 0.0
  %109 = vmatpush1.msra.mxu0 0.0
  %110 = vmatprep.subr.mxu0 0.0
  %111 = vmatpush1.msra.mxu0 0.0
  %112 = vmatprep.subr.mxu0 0.0
  %113 = vmatpush1.msra.mxu0 0.0
  %114 = vmatprep.subr.mxu0 0.0
  %115 = vmatpush1.msra.mxu0 0.0
  %116 = vmatprep.mubr.f32.mxu0 0.0
  %117 = vmatmul.mubr.f32.gmra.mrb[0].mxu0 %v50
  %v118 = vpop.f32.mrb[0].mxu0
  %v119 = vadd.f32 0.0, %v118
  %v120 = vpop.f32.mrb[0].mxu0
  %v121 = vadd.f32 0.0, %v120
  %122 = vdwg.mxu0
  %123 = vmatprep.subr.mxu0 %v15
  %124 = vmatpush1.msra.mxu0 %v14
  %125 = vmatprep.subr.mxu0 %v19
  %126 = vmatpush1.msra.mxu0 %v18
  %127 = vmatprep.subr.mxu0 %v23
  %128 = vmatpush1.msra.mxu0 %v22
  %129 = vmatprep.subr.mxu0 %v27
  %130 = vmatpush1.msra.mxu0 %v26
  %131 = vmatprep.subr.mxu0 %v31
  %132 = vmatpush1.msra.mxu0 %v30
  %133 = vmatprep.subr.mxu0 %v35
  %134 = vmatpush1.msra.mxu0 %v34
  %135 = vmatprep.subr.mxu0 %v39
  %136 = vmatpush1.msra.mxu0 %v38
  %137 = vmatprep.subr.mxu0 %v43
  %138 = vmatpush1.msra.mxu0 %v42
  %139 = vmatprep.subr.mxu0 %v47
  %140 = vmatpush1.msra.mxu0 %v46
  %141 = vmatprep.subr.mxu0 0.0
  %142 = vmatpush1.msra.mxu0 0.0
  %143 = vmatprep.subr.mxu0 0.0
  %144 = vmatpush1.msra.mxu0 0.0
  %145 = vmatprep.subr.mxu0 0.0
  %146 = vmatpush1.msra.mxu0 0.0
  %147 = vmatprep.subr.mxu0 0.0
  %148 = vmatpush1.msra.mxu0 0.0
  %149 = vmatprep.subr.mxu0 0.0
  %150 = vmatpush1.msra.mxu0 0.0
  %151 = vmatprep.subr.mxu0 0.0
  %152 = vmatpush1.msra.mxu0 0.0
  %153 = vmatprep.subr.mxu0 0.0
  %154 = vmatpush1.msra.mxu0 0.0
  %155 = vmatprep.subr.mxu0 0.0
  %156 = vmatpush1.msra.mxu0 0.0
  %157 = vmatprep.subr.mxu0 0.0
  %158 = vmatpush1.msra.mxu0 0.0
  %159 = vmatprep.subr.mxu0 0.0
  %160 = vmatpush1.msra.mxu0 0.0
  %161 = vmatprep.subr.mxu0 0.0
  %162 = vmatpush1.msra.mxu0 0.0
  %163 = vmatprep.subr.mxu0 0.0
  %164 = vmatpush1.msra.mxu0 0.0
  %165 = vmatprep.subr.mxu0 0.0
  %166 = vmatpush1.msra.mxu0 0.0
  %167 = vmatprep.subr.mxu0 0.0
  %168 = vmatpush1.msra.mxu0 0.0
  %169 = vmatprep.subr.mxu0 0.0
  %170 = vmatpush1.msra.mxu0 0.0
  %171 = vmatprep.subr.mxu0 0.0
  %172 = vmatpush1.msra.mxu0 0.0
  %173 = vmatprep.subr.mxu0 0.0
  %174 = vmatpush1.msra.mxu0 0.0
  %175 = vmatprep.subr.mxu0 0.0
  %176 = vmatpush1.msra.mxu0 0.0
  %177 = vmatprep.subr.mxu0 0.0
  %178 = vmatpush1.msra.mxu0 0.0
  %179 = vmatprep.subr.mxu0 0.0
  %180 = vmatpush1.msra.mxu0 0.0
  %181 = vmatprep.subr.mxu0 0.0
  %182 = vmatpush1.msra.mxu0 0.0
  %183 = vmatprep.subr.mxu0 0.0
  %184 = vmatpush1.msra.mxu0 0.0
  %185 = vmatprep.subr.mxu0 0.0
  %186 = vmatpush1.msra.mxu0 0.0
  %187 = vmatprep.mubr.f32.mxu0 0.0
  %188 = vmatmul.mubr.f32.gmra.mrb[0].mxu0 %v50
  %v189 = vpop.f32.mrb[0].mxu0
  %v190 = vadd.f32 0.0, %v189
  %v191 = vpop.f32.mrb[0].mxu0
  %v192 = vadd.f32 0.0, %v191
  %193 = vdwg.mxu0
  %v194 = vmul.f32 %v119, 0.70710677
  %v195 = vmul.f32 %v121, 0.70710677
  %v196 = vmul.f32 %v190, 0.70710677
  %v197 = vmul.f32 %v192, 0.70710677
  %vm198 = vcmp.ge.f32.partialorder %v194, 0.0
  %vm199 = vcmp.ge.f32.partialorder %v195, 0.0
  %vm200 = vcmp.ge.f32.partialorder %v196, 0.0
  %vm201 = vcmp.ge.f32.partialorder %v197, 0.0
  %v202 = vsel %vm198, 1.0, -1.0
  %v203 = vsel %vm199, 1.0, -1.0
  %v204 = vsel %vm200, 1.0, -1.0
  %v205 = vsel %vm201, 1.0, -1.0
  %v206 = vand.u32 2147483647, %v194
  %v207 = vand.u32 2147483647, %v195
  %v208 = vand.u32 2147483647, %v196
  %v209 = vand.u32 2147483647, %v197
  %v210 = vmul.f32 %v206, 0.3275911
  %v211 = vmul.f32 %v207, 0.3275911
  %v212 = vmul.f32 %v208, 0.3275911
  %v213 = vmul.f32 %v209, 0.3275911
  %v214 = vadd.f32 %v210, 1.0
  %v215 = vadd.f32 %v211, 1.0
  %v216 = vadd.f32 %v212, 1.0
  %v217 = vadd.f32 %v213, 1.0
  %v218 = vrcp.pop %v214
  %v219 = vrcp.pop %v215
  %v220 = vrcp.pop %v216
  %v221 = vrcp.pop %v217
  %v222 = vmul.f32 %v218, 1.0614054
  %v223 = vmul.f32 %v219, 1.0614054
  %v224 = vmul.f32 %v220, 1.0614054
  %v225 = vmul.f32 %v221, 1.0614054
  %v226 = vadd.f32 %v222, -1.4531521
  %v227 = vadd.f32 %v223, -1.4531521
  %v228 = vadd.f32 %v224, -1.4531521
  %v229 = vadd.f32 %v225, -1.4531521
  %v230 = vmul.f32 %v226, %v218
  %v231 = vmul.f32 %v227, %v219
  %v232 = vmul.f32 %v228, %v220
  %v233 = vmul.f32 %v229, %v221
  %v234 = vadd.f32 %v230, 1.4214138
  %v235 = vadd.f32 %v231, 1.4214138
  %v236 = vadd.f32 %v232, 1.4214138
  %v237 = vadd.f32 %v233, 1.4214138
  %v238 = vmul.f32 %v234, %v218
  %v239 = vmul.f32 %v235, %v219
  %v240 = vmul.f32 %v236, %v220
  %v241 = vmul.f32 %v237, %v221
  %v242 = vadd.f32 %v238, -0.28449672
  %v243 = vadd.f32 %v239, -0.28449672
  %v244 = vadd.f32 %v240, -0.28449672
  %v245 = vadd.f32 %v241, -0.28449672
  %v246 = vmul.f32 %v242, %v218
  %v247 = vmul.f32 %v243, %v219
  %v248 = vmul.f32 %v244, %v220
  %v249 = vmul.f32 %v245, %v221
  %v250 = vadd.f32 %v246, 0.2548296
  %v251 = vadd.f32 %v247, 0.2548296
  %v252 = vadd.f32 %v248, 0.2548296
  %v253 = vadd.f32 %v249, 0.2548296
  %v254 = vmul.f32 %v250, %v218
  %v255 = vmul.f32 %v251, %v219
  %v256 = vmul.f32 %v252, %v220
  %v257 = vmul.f32 %v253, %v221
  %v258 = vsub.f32 0.0, %v206
  %v259 = vsub.f32 0.0, %v207
  %v260 = vsub.f32 0.0, %v208
  %v261 = vsub.f32 0.0, %v209
  %v262 = vmul.f32 %v258, %v206
  %v263 = vmul.f32 %v259, %v207
  %v264 = vmul.f32 %v260, %v208
  %v265 = vmul.f32 %v261, %v209
  %v266 = vmul.f32 %v262, 1.442695
  %v267 = vpow.pop %v266
  %v268 = vmul.f32 %v263, 1.442695
  %v269 = vpow.pop %v268
  %v270 = vmul.f32 %v264, 1.442695
  %v271 = vpow.pop %v270
  %v272 = vmul.f32 %v265, 1.442695
  %v273 = vpow.pop %v272
  %v274 = vmul.f32 %v254, %v267
  %v275 = vmul.f32 %v255, %v269
  %v276 = vmul.f32 %v256, %v271
  %v277 = vmul.f32 %v257, %v273
  %v278 = vsub.f32 1.0, %v274
  %v279 = vsub.f32 1.0, %v275
  %v280 = vsub.f32 1.0, %v276
  %v281 = vsub.f32 1.0, %v277
  %v282 = vmul.f32 %v202, %v278
  %v283 = vmul.f32 %v203, %v279
  %v284 = vmul.f32 %v204, %v280
  %v285 = vmul.f32 %v205, %v281
  %v286 = vmul.f32 %v119, 0.5
  %v287 = vmul.f32 %v121, 0.5
  %v288 = vmul.f32 %v190, 0.5
  %v289 = vmul.f32 %v192, 0.5
  %v290 = vadd.f32 %v282, 1.0
  %v291 = vadd.f32 %v283, 1.0
  %v292 = vadd.f32 %v284, 1.0
  %v293 = vadd.f32 %v285, 1.0
  %v294 = vmul.f32 %v286, %v290
  %v295 = vmul.f32 %v287, %v291
  %v296 = vmul.f32 %v288, %v292
  %v297 = vmul.f32 %v289, %v293
  %298 = vst [vmem:[%s2] sm:$0xff] %v294
  %299 = vst [vmem:[%s2 + $0x8] sm:$0xff] %v295
  %300 = vst [vmem:[%s2 + $0x10] sm:$0xff] %v296
  %301 = vst [vmem:[%s2 + $0x18] sm:$0xff] %v297
  // Predicated region
  $region10: #{global_context_extractor.3} parent=0 // pred_check
    _
  $region11: #{global_context_extractor.3} parent=0 // pred_check_branch
    %303 = sbr.rel (0) target = $region13
  $region12: #{global_context_extractor.3} parent=0 // pred_region
    _
  $region13: #{global_context_extractor.3} parent=0 // pred_fallthru
    _
  // Predicated region
  $region14: #{global_context_extractor.3} parent=0 // pred_check
    _
  $region15: #{global_context_extractor.3} parent=0 // pred_check_branch
    %305 = sbr.rel (0) target = $region17
  $region16: #{global_context_extractor.3} parent=0 // pred_region
    _
  $region17: #{global_context_extractor.3} parent=0 // pred_fallthru
    _

// kernel: global_context_extractor.4
$region0: #{global_context_extractor.4}
  #allocation0 [shape = 'u32[]', space=smem, size = 0x4, offset = 0x4, fixed_abs, tag = 'smem constant byte address 0x4 - core index']
  #allocation1 [shape = 'u32[144,128]{1,0:T(1,128)}', space=vmem, size = 0x12000, scoped, tag = 'internal scratch']
  %s0 = inlined_call_operand.vmem [shape: f32[8,72], index: 0, kind: input, shape index: {}]
  %s1 = inlined_call_operand.vmem [shape: f32[72,128], index: 1, kind: input, shape index: {}]
  %s2 = inlined_call_operand.vmem [shape: f32[8,128], index: 2, kind: output, shape index: {}]
  %s3 = sld [smem:[#allocation0]]
  $region18: #{global_context_extractor.4} parent=0
    _
  %s5 = ssub.s32 1, %s3
  %s6 = scalar_select 0, %s5, %s3
  // Predicated region
  $region2: #{global_context_extractor.4} parent=0 // pred_check
    _
  $region3: #{global_context_extractor.4} parent=0 // pred_check_branch
    %8 = sbr.rel (0) target = $region5
  $region4: #{global_context_extractor.4} parent=0 // pred_region
    _
  $region5: #{global_context_extractor.4} parent=0 // pred_fallthru
    _
  // Predicated region
  $region6: #{global_context_extractor.4} parent=0 // pred_check
    _
  $region7: #{global_context_extractor.4} parent=0 // pred_check_branch
    %10 = sbr.rel (0) target = $region9
  $region8: #{global_context_extractor.4} parent=0 // pred_region
    _
  $region9: #{global_context_extractor.4} parent=0 // pred_fallthru
    _
  %v11 = vld [vmem:[%s0] sm:$0xff]
  %v12 = vld [vmem:[%s1] sm:$0xff]
  %v13 = vld [vmem:[%s1 + $0x8] sm:$0xff]
  %v14 = vld [vmem:[%s1 + $0x10] sm:$0xff]
  %v15 = vld [vmem:[%s1 + $0x18] sm:$0xff]
  %v16 = vld [vmem:[%s1 + $0x20] sm:$0xff]
  %v17 = vld [vmem:[%s1 + $0x28] sm:$0xff]
  %v18 = vld [vmem:[%s1 + $0x30] sm:$0xff]
  %v19 = vld [vmem:[%s1 + $0x38] sm:$0xff]
  %v20 = vld [vmem:[%s1 + $0x40] sm:$0xff]
  %vm21 = vcmask 588800
  %v23 = vsel %vm21, %v11, 0
  %25 = vmatprep.subr.mxu0 0.0
  %26 = vmatpush1.msra.mxu0 %v12
  %27 = vmatprep.subr.mxu0 0.0
  %28 = vmatpush1.msra.mxu0 %v13
  %29 = vmatprep.subr.mxu0 0.0
  %30 = vmatpush1.msra.mxu0 %v14
  %31 = vmatprep.subr.mxu0 0.0
  %32 = vmatpush1.msra.mxu0 %v15
  %33 = vmatprep.subr.mxu0 0.0
  %34 = vmatpush1.msra.mxu0 %v16
  %35 = vmatprep.subr.mxu0 0.0
  %36 = vmatpush1.msra.mxu0 %v17
  %37 = vmatprep.subr.mxu0 0.0
  %38 = vmatpush1.msra.mxu0 %v18
  %39 = vmatprep.subr.mxu0 0.0
  %40 = vmatpush1.msra.mxu0 %v19
  %41 = vmatprep.subr.mxu0 0.0
  %42 = vmatpush1.msra.mxu0 %v20
  %43 = vmatprep.subr.mxu0 0.0
  %44 = vmatpush1.msra.mxu0 0.0
  %45 = vmatprep.subr.mxu0 0.0
  %46 = vmatpush1.msra.mxu0 0.0
  %47 = vmatprep.subr.mxu0 0.0
  %48 = vmatpush1.msra.mxu0 0.0
  %49 = vmatprep.subr.mxu0 0.0
  %50 = vmatpush1.msra.mxu0 0.0
  %51 = vmatprep.subr.mxu0 0.0
  %52 = vmatpush1.msra.mxu0 0.0
  %53 = vmatprep.subr.mxu0 0.0
  %54 = vmatpush1.msra.mxu0 0.0
  %55 = vmatprep.subr.mxu0 0.0
  %56 = vmatpush1.msra.mxu0 0.0
  %57 = vmatprep.subr.mxu0 0.0
  %58 = vmatpush1.msra.mxu0 0.0
  %59 = vmatprep.subr.mxu0 0.0
  %60 = vmatpush1.msra.mxu0 0.0
  %61 = vmatprep.subr.mxu0 0.0
  %62 = vmatpush1.msra.mxu0 0.0
  %63 = vmatprep.subr.mxu0 0.0
  %64 = vmatpush1.msra.mxu0 0.0
  %65 = vmatprep.subr.mxu0 0.0
  %66 = vmatpush1.msra.mxu0 0.0
  %67 = vmatprep.subr.mxu0 0.0
  %68 = vmatpush1.msra.mxu0 0.0
  %69 = vmatprep.subr.mxu0 0.0
  %70 = vmatpush1.msra.mxu0 0.0
  %71 = vmatprep.subr.mxu0 0.0
  %72 = vmatpush1.msra.mxu0 0.0
  %73 = vmatprep.subr.mxu0 0.0
  %74 = vmatpush1.msra.mxu0 0.0
  %75 = vmatprep.subr.mxu0 0.0
  %76 = vmatpush1.msra.mxu0 0.0
  %77 = vmatprep.subr.mxu0 0.0
  %78 = vmatpush1.msra.mxu0 0.0
  %79 = vmatprep.subr.mxu0 0.0
  %80 = vmatpush1.msra.mxu0 0.0
  %81 = vmatprep.subr.mxu0 0.0
  %82 = vmatpush1.msra.mxu0 0.0
  %83 = vmatprep.subr.mxu0 0.0
  %84 = vmatpush1.msra.mxu0 0.0
  %85 = vmatprep.subr.mxu0 0.0
  %86 = vmatpush1.msra.mxu0 0.0
  %87 = vmatprep.subr.mxu0 0.0
  %88 = vmatpush1.msra.mxu0 0.0
  %89 = vmatprep.mubr.f32.mxu0 0.0
  %90 = vmatmul.mubr.f32.gmra.mrb[0].mxu0 %v23
  %v91 = vpop.f32.mrb[0].mxu0
  %v92 = vadd.f32 0.0, %v91
  %v93 = vpop.f32.mrb[0].mxu0
  %94 = vdwg.mxu0
  %v95 = vmul.f32 %v92, 0.70710677
  %vm96 = vcmp.ge.f32.partialorder %v95, 0.0
  %v97 = vsel %vm96, 1.0, -1.0
  %v98 = vand.u32 2147483647, %v95
  %v99 = vmul.f32 %v98, 0.3275911
  %v100 = vadd.f32 %v99, 1.0
  %v101 = vrcp.pop %v100
  %v102 = vmul.f32 %v101, 1.0614054
  %v103 = vadd.f32 %v102, -1.4531521
  %v104 = vmul.f32 %v103, %v101
  %v105 = vadd.f32 %v104, 1.4214138
  %v106 = vmul.f32 %v105, %v101
  %v107 = vadd.f32 %v106, -0.28449672
  %v108 = vmul.f32 %v107, %v101
  %v109 = vadd.f32 %v108, 0.2548296
  %v110 = vmul.f32 %v109, %v101
  %v111 = vsub.f32 0.0, %v98
  %v112 = vmul.f32 %v111, %v98
  %v113 = vmul.f32 %v112, 1.442695
  %v114 = vpow.pop %v113
  %v115 = vmul.f32 %v110, %v114
  %v116 = vsub.f32 1.0, %v115
  %v117 = vmul.f32 %v97, %v116
  %v118 = vmul.f32 %v92, 0.5
  %v119 = vadd.f32 %v117, 1.0
  %v120 = vmul.f32 %v118, %v119
  %121 = vst [vmem:[%s2] sm:$0xff] %v120
  // Predicated region
  $region10: #{global_context_extractor.4} parent=0 // pred_check
    _
  $region11: #{global_context_extractor.4} parent=0 // pred_check_branch
    %123 = sbr.rel (0) target = $region13
  $region12: #{global_context_extractor.4} parent=0 // pred_region
    _
  $region13: #{global_context_extractor.4} parent=0 // pred_fallthru
    _
  // Predicated region
  $region14: #{global_context_extractor.4} parent=0 // pred_check
    _
  $region15: #{global_context_extractor.4} parent=0 // pred_check_branch
    %125 = sbr.rel (0) target = $region17
  $region16: #{global_context_extractor.4} parent=0 // pred_region
    _
  $region17: #{global_context_extractor.4} parent=0 // pred_fallthru
    _

// kernel: global_context_extractor.5
$region0: #{global_context_extractor.5}
  #allocation0 [shape = 'u32[]', space=smem, size = 0x4, offset = 0x4, fixed_abs, tag = 'smem constant byte address 0x4 - core index']
  #allocation1 [shape = 'u32[144,128]{1,0:T(1,128)}', space=vmem, size = 0x12000, scoped, tag = 'internal scratch']
  %s0 = inlined_call_operand.vmem [shape: f32[8,200], index: 0, kind: input, shape index: {}]
  %s1 = inlined_call_operand.vmem [shape: f32[200,128], index: 1, kind: input, shape index: {}]
  %s2 = inlined_call_operand.vmem [shape: f32[8,128], index: 2, kind: output, shape index: {}]
  %s3 = sld [smem:[#allocation0]]
  $region18: #{global_context_extractor.5} parent=0
    _
  %s5 = ssub.s32 1, %s3
  %s6 = scalar_select 0, %s5, %s3
  // Predicated region
  $region2: #{global_context_extractor.5} parent=0 // pred_check
    _
  $region3: #{global_context_extractor.5} parent=0 // pred_check_branch
    %8 = sbr.rel (0) target = $region5
  $region4: #{global_context_extractor.5} parent=0 // pred_region
    _
  $region5: #{global_context_extractor.5} parent=0 // pred_fallthru
    _
  // Predicated region
  $region6: #{global_context_extractor.5} parent=0 // pred_check
    _
  $region7: #{global_context_extractor.5} parent=0 // pred_check_branch
    %10 = sbr.rel (0) target = $region9
  $region8: #{global_context_extractor.5} parent=0 // pred_region
    _
  $region9: #{global_context_extractor.5} parent=0 // pred_fallthru
    _
  %v11 = vld [vmem:[%s0] sm:$0xff]
  %v12 = vld [vmem:[%s0 + $0x8] sm:$0xff]
  %v13 = vld [vmem:[%s1] sm:$0xff]
  %v14 = vld [vmem:[%s1 + $0x8] sm:$0xff]
  %v15 = vld [vmem:[%s1 + $0x10] sm:$0xff]
  %v16 = vld [vmem:[%s1 + $0x18] sm:$0xff]
  %v17 = vld [vmem:[%s1 + $0x20] sm:$0xff]
  %v18 = vld [vmem:[%s1 + $0x28] sm:$0xff]
  %v19 = vld [vmem:[%s1 + $0x30] sm:$0xff]
  %v20 = vld [vmem:[%s1 + $0x38] sm:$0xff]
  %v21 = vld [vmem:[%s1 + $0x40] sm:$0xff]
  %v22 = vld [vmem:[%s1 + $0x48] sm:$0xff]
  %v23 = vld [vmem:[%s1 + $0x50] sm:$0xff]
  %v24 = vld [vmem:[%s1 + $0x58] sm:$0xff]
  %v25 = vld [vmem:[%s1 + $0x60] sm:$0xff]
  %v26 = vld [vmem:[%s1 + $0x68] sm:$0xff]
  %v27 = vld [vmem:[%s1 + $0x70] sm:$0xff]
  %v28 = vld [vmem:[%s1 + $0x78] sm:$0xff]
  %v29 = vld [vmem:[%s1 + $0x80] sm:$0xff]
  %v30 = vld [vmem:[%s1 + $0x88] sm:$0xff]
  %v31 = vld [vmem:[%s1 + $0x90] sm:$0xff]
  %v32 = vld [vmem:[%s1 + $0x98] sm:$0xff]
  %v33 = vld [vmem:[%s1 + $0xa0] sm:$0xff]
  %v34 = vld [vmem:[%s1 + $0xa8] sm:$0xff]
  %v35 = vld [vmem:[%s1 + $0xb0] sm:$0xff]
  %v36 = vld [vmem:[%s1 + $0xb8] sm:$0xff]
  %v37 = vld [vmem:[%s1 + $0xc0] sm:$0xff]
  %vm38 = vcmask 588800
  %v40 = vsel %vm38, %v12, 0
  %42 = vmatprep.subr.mxu0 0.0
  %43 = vmatpush1.msra.mxu0 %v13
  %44 = vmatprep.subr.mxu0 0.0
  %45 = vmatpush1.msra.mxu0 %v14
  %46 = vmatprep.subr.mxu0 0.0
  %47 = vmatpush1.msra.mxu0 %v15
  %48 = vmatprep.subr.mxu0 0.0
  %49 = vmatpush1.msra.mxu0 %v16
  %50 = vmatprep.subr.mxu0 0.0
  %51 = vmatpush1.msra.mxu0 %v17
  %52 = vmatprep.subr.mxu0 0.0
  %53 = vmatpush1.msra.mxu0 %v18
  %54 = vmatprep.subr.mxu0 0.0
  %55 = vmatpush1.msra.mxu0 %v19
  %56 = vmatprep.subr.mxu0 0.0
  %57 = vmatpush1.msra.mxu0 %v20
  %58 = vmatprep.subr.mxu0 0.0
  %59 = vmatpush1.msra.mxu0 %v21
  %60 = vmatprep.subr.mxu0 0.0
  %61 = vmatpush1.msra.mxu0 %v22
  %62 = vmatprep.subr.mxu0 0.0
  %63 = vmatpush1.msra.mxu0 %v23
  %64 = vmatprep.subr.mxu0 0.0
  %65 = vmatpush1.msra.mxu0 %v24
  %66 = vmatprep.subr.mxu0 0.0
  %67 = vmatpush1.msra.mxu0 %v25
  %68 = vmatprep.subr.mxu0 0.0
  %69 = vmatpush1.msra.mxu0 %v26
  %70 = vmatprep.subr.mxu0 0.0
  %71 = vmatpush1.msra.mxu0 %v27
  %72 = vmatprep.subr.mxu0 0.0
  %73 = vmatpush1.msra.mxu0 %v28
  %74 = vmatprep.subr.mxu0 0.0
  %75 = vmatpush1.msra.mxu0 %v29
  %76 = vmatprep.subr.mxu0 0.0
  %77 = vmatpush1.msra.mxu0 %v30
  %78 = vmatprep.subr.mxu0 0.0
  %79 = vmatpush1.msra.mxu0 %v31
  %80 = vmatprep.subr.mxu0 0.0
  %81 = vmatpush1.msra.mxu0 %v32
  %82 = vmatprep.subr.mxu0 0.0
  %83 = vmatpush1.msra.mxu0 %v33
  %84 = vmatprep.subr.mxu0 0.0
  %85 = vmatpush1.msra.mxu0 %v34
  %86 = vmatprep.subr.mxu0 0.0
  %87 = vmatpush1.msra.mxu0 %v35
  %88 = vmatprep.subr.mxu0 0.0
  %89 = vmatpush1.msra.mxu0 %v36
  %90 = vmatprep.subr.mxu0 0.0
  %91 = vmatpush1.msra.mxu0 %v37
  %92 = vmatprep.subr.mxu0 0.0
  %93 = vmatpush1.msra.mxu0 0.0
  %94 = vmatprep.subr.mxu0 0.0
  %95 = vmatpush1.msra.mxu0 0.0
  %96 = vmatprep.subr.mxu0 0.0
  %97 = vmatpush1.msra.mxu0 0.0
  %98 = vmatprep.subr.mxu0 0.0
  %99 = vmatpush1.msra.mxu0 0.0
  %100 = vmatprep.subr.mxu0 0.0
  %101 = vmatpush1.msra.mxu0 0.0
  %102 = vmatprep.subr.mxu0 0.0
  %103 = vmatpush1.msra.mxu0 0.0
  %104 = vmatprep.subr.mxu0 0.0
  %105 = vmatpush1.msra.mxu0 0.0
  %106 = vmatprep.mubr.f32.mxu0 %v40
  %107 = vmatmul.mubr.f32.gmra.mrb[0].mxu0 %v11
  %v108 = vpop.f32.mrb[0].mxu0
  %v109 = vadd.f32 0.0, %v108
  %v110 = vpop.f32.mrb[0].mxu0
  %111 = vdwg.mxu0
  %v112 = vmul.f32 %v109, 0.70710677
  %vm113 = vcmp.ge.f32.partialorder %v112, 0.0
  %v114 = vsel %vm113, 1.0, -1.0
  %v115 = vand.u32 2147483647, %v112
  %v116 = vmul.f32 %v115, 0.3275911
  %v117 = vadd.f32 %v116, 1.0
  %v118 = vrcp.pop %v117
  %v119 = vmul.f32 %v118, 1.0614054
  %v120 = vadd.f32 %v119, -1.4531521
  %v121 = vmul.f32 %v120, %v118
  %v122 = vadd.f32 %v121, 1.4214138
  %v123 = vmul.f32 %v122, %v118
  %v124 = vadd.f32 %v123, -0.28449672
  %v125 = vmul.f32 %v124, %v118
  %v126 = vadd.f32 %v125, 0.2548296
  %v127 = vmul.f32 %v126, %v118
  %v128 = vsub.f32 0.0, %v115
  %v129 = vmul.f32 %v128, %v115
  %v130 = vmul.f32 %v129, 1.442695
  %v131 = vpow.pop %v130
  %v132 = vmul.f32 %v127, %v131
  %v133 = vsub.f32 1.0, %v132
  %v134 = vmul.f32 %v114, %v133
  %v135 = vmul.f32 %v109, 0.5
  %v136 = vadd.f32 %v134, 1.0
  %v137 = vmul.f32 %v135, %v136
  %138 = vst [vmem:[%s2] sm:$0xff] %v137
  // Predicated region
  $region10: #{global_context_extractor.5} parent=0 // pred_check
    _
  $region11: #{global_context_extractor.5} parent=0 // pred_check_branch
    %140 = sbr.rel (0) target = $region13
  $region12: #{global_context_extractor.5} parent=0 // pred_region
    _
  $region13: #{global_context_extractor.5} parent=0 // pred_fallthru
    _
  // Predicated region
  $region14: #{global_context_extractor.5} parent=0 // pred_check
    _
  $region15: #{global_context_extractor.5} parent=0 // pred_check_branch
    %142 = sbr.rel (0) target = $region17
  $region16: #{global_context_extractor.5} parent=0 // pred_region
    _
  $region17: #{global_context_extractor.5} parent=0 // pred_fallthru
    _

</llo_original>
